<compile_context>
chip_gen: v5e
topology: v5e:2x2
jax: 0.10.0
libtpu: 0.0.40
codegen_flags: <defaults>
</compile_context>

<pallas_src>
import functools

import jax
import jax.numpy as jnp
from jax import lax
from jax.experimental import pallas as pl
from jax.experimental.pallas import tpu as pltpu


# --------------------------------------------------------------------------
# Kernels
# --------------------------------------------------------------------------

def _gcn_fused_kernel(x_ref, wc_ref, bagg_ref, o_ref):
    """Fused (conv + graph aggregation) as one matmul.

    x_ref:    (tn, V*Cin)        rows = flattened (b, t), cols = (j, ci)
    wc_ref:   (V*Cin, Cout*V)    Wc[(j,ci),(c,h)] = Wbd[ci,c] * A[j,h]
    bagg_ref: (1, Cout*V)        bias[c] * sum_j A[j,h]   (f32)
    o_ref:    (tn, Cout*V)       lane-dense output block  (f32)
    """
    y = jnp.dot(x_ref[...], wc_ref[...],
                preferred_element_type=jnp.float32)       # (tn, Cout*V) f32 acc
    y = y + bagg_ref[...].astype(jnp.float32)             # f32 epilogue
    o_ref[...] = y.astype(o_ref.dtype)


def _gcn_unfused_kernel(x_ref, w_ref, b_ref, a_ref, o_ref):
    """Two-matmul fallback for large-channel configs.

    x_ref: (tn*V, Cin)    rows = flattened (b, t, j)
    w_ref: (Cin, Cout)    block-diagonal grouped-conv weight
    b_ref: (1, Cout)      conv bias (f32)
    a_ref: (V, V)         adjacency (f32)
    o_ref: (tn, Cout, V)
    """
    tn, cout, v = o_ref.shape
    # 1x1 grouped conv == matmul with block-diagonal weight (MXU).
    y = jnp.dot(x_ref[...], w_ref[...],
                preferred_element_type=jnp.float32)       # (tn*V, Cout)
    y = y + b_ref[...].astype(jnp.float32)
    y = y.reshape(tn, v, cout)
    # graph aggregation: out[n, c, h] = sum_j y[n, j, c] * A[j, h]
    out = lax.dot_general(
        y, a_ref[...].astype(jnp.float32),
        dimension_numbers=(((1,), (0,)), ((), ())),
        preferred_element_type=jnp.float32)               # (tn, Cout, V)
    o_ref[...] = out.astype(o_ref.dtype)


# --------------------------------------------------------------------------
# Wrapper
# --------------------------------------------------------------------------

def _pick_row_tile(n_rows, max_tile=128):
    """Largest multiple-of-8 divisor of n_rows that is <= max_tile and still
    leaves >= 2 grid steps (keeps both v7x TensorCores busy).  Falls back to a
    single full-extent step when no such divisor exists."""
    best = None
    d = 8
    limit = min(n_rows // 2, max_tile)
    while d <= limit:
        if n_rows % d == 0:
            best = d
        d += 8
    return best if best is not None else n_rows


def _block_diag_weight(weight, groups, cin, cout):
    """PyTorch grouped Conv2d weight (Cout, Cin/G, 1, 1) -> dense (Cin, Cout)
    block-diagonal matrix so the grouped 1x1 conv is an exact matmul."""
    cin_g = cin // groups
    cout_g = cout // groups
    w2 = weight[:, :, 0, 0]                              # (Cout, cin_g)
    wbd = jnp.zeros((cin, cout), dtype=jnp.float32)
    for g in range(groups):
        wbd = wbd.at[g * cin_g:(g + 1) * cin_g,
                     g * cout_g:(g + 1) * cout_g].set(
                         w2[g * cout_g:(g + 1) * cout_g, :].T.astype(jnp.float32))
    return wbd


_FUSE_WEIGHT_BYTES_MAX = 8 * 1024 * 1024   # fuse only while Wc stays VMEM-friendly


def gcn_unit_forward(x_nchw, weight, bias, adjacent, groups,
                     compute_dtype=jnp.bfloat16, fuse=None, max_row_tile=128):
    """Pallas implementation of GCNUnit.forward (eval mode).

    x_nchw:   [B, C_in, T, V]           float32
    weight:   [C_out*K, C_in//G, 1, 1]  (PyTorch grouped Conv2d weight)
    bias:     [C_out*K]
    adjacent: [V, V]
    returns:  [B, C_out*K, T, V]        ('bcfh')
    """
    B, Cin, T, V = x_nchw.shape
    Cout = weight.shape[0]
    N = B * T

    if fuse is None:
        fuse = (V * Cin) * (Cout * V) * 4 <= _FUSE_WEIGHT_BYTES_MAX

    tn = _pick_row_tile(N, max_row_tile)
    grid = (N // tn,)
    cparams = pltpu.CompilerParams(
        dimension_semantics=("parallel",),
        vmem_limit_bytes=32 * 1024 * 1024)

    wbd = _block_diag_weight(weight, groups, Cin, Cout)   # (Cin, Cout) f32
    bias_f32 = bias.astype(jnp.float32)
    adj_f32 = adjacent.astype(jnp.float32)

    if fuse:
        # ---- fused single-matmul path (small-channel configs) -------------
        # x laid out as (N, V*Cin): one wrapper transpose; output transpose is
        # the only other wrapper relayout.
        x2 = jnp.transpose(x_nchw, (0, 2, 3, 1)).reshape(N, V * Cin)
        x2 = x2.astype(compute_dtype)
        # Wc[(j,ci),(c,h)] = Wbd[ci,c] * A[j,h]
        wc = jnp.einsum("ic,jh->jich", wbd, adj_f32).reshape(V * Cin, Cout * V)
        wc = wc.astype(compute_dtype)
        # aggregated bias: b[c] * sum_j A[j,h]
        bagg = jnp.outer(bias_f32, adj_f32.sum(axis=0)).reshape(1, Cout * V)

        out2 = pl.pallas_call(
            _gcn_fused_kernel,
            out_shape=jax.ShapeDtypeStruct((N, Cout * V), jnp.float32),
            grid=grid,
            in_specs=[
                pl.BlockSpec((tn, V * Cin), lambda i: (i, 0)),
                pl.BlockSpec((V * Cin, Cout * V), lambda i: (0, 0)),
                pl.BlockSpec((1, Cout * V), lambda i: (0, 0)),
            ],
            out_specs=pl.BlockSpec((tn, Cout * V), lambda i: (i, 0)),
            compiler_params=cparams,
        )(x2, wc, bagg)

        out = out2.reshape(B, T, Cout, V)
    else:
        # ---- two-matmul fallback path (large-channel configs) -------------
        x2 = jnp.transpose(x_nchw, (0, 2, 3, 1)).reshape(N * V, Cin)
        x2 = x2.astype(compute_dtype)
        wbd_c = wbd.astype(compute_dtype)
        b2 = bias_f32.reshape(1, Cout)

        out3 = pl.pallas_call(
            _gcn_unfused_kernel,
            out_shape=jax.ShapeDtypeStruct((N, Cout, V), jnp.float32),
            grid=grid,
            in_specs=[
                pl.BlockSpec((tn * V, Cin), lambda i: (i, 0)),
                pl.BlockSpec((Cin, Cout), lambda i: (0, 0)),
                pl.BlockSpec((1, Cout), lambda i: (0, 0)),
                pl.BlockSpec((V, V), lambda i: (0, 0)),
            ],
            out_specs=pl.BlockSpec((tn, Cout, V), lambda i: (i, 0, 0)),
            compiler_params=cparams,
        )(x2, wbd_c, b2, adj_f32)

        out = out3.reshape(B, T, Cout, V)

    # kernel layout [B, T, C, H] -> PyTorch 'bcfh' = [B, C, T, H]
    out = jnp.transpose(out, (0, 2, 1, 3)).astype(x_nchw.dtype)
    return out


def gcn_unit_reference(x_nchw, weight, bias, adjacent, groups):
    """Pure-JAX reference mirroring the PyTorch module (eval mode)."""
    y = lax.conv_general_dilated(
        x_nchw, weight,
        window_strides=(1, 1), padding="VALID",
        dimension_numbers=("NCHW", "OIHW", "NCHW"),
        feature_group_count=groups)
    y = y + bias[None, :, None, None]
    return jnp.einsum("bcfj,jh->bcfh", y, adjacent)


# --------------------------------------------------------------------------
# Self-test
# --------------------------------------------------------------------------

if __name__ == "__main__":
    # Module config (in_channel must be divisible by groups).
    in_channel = 4
    out_channel = 8
    groups = 2
    kernel_size = 2                       # num adjacency partitions
    conv_out = out_channel * kernel_size  # conv output channels = 16

    B, T, V = 2, 8, 16                    # batch, frames, joints

    key = jax.random.PRNGKey(0)
    kx, kw, kb, ka = jax.random.split(key, 4)

    x = jax.random.normal(kx, (B, in_channel, T, V), dtype=jnp.float32)
    weight = 0.1 * jax.random.normal(
        kw, (conv_out, in_channel // groups, 1, 1), dtype=jnp.float32)
    bias = 0.1 * jax.random.normal(kb, (conv_out,), dtype=jnp.float32)
    adjacent = jax.random.uniform(ka, (V, V), dtype=jnp.float32)

    ref = jax.block_until_ready(
        gcn_unit_reference(x, weight, bias, adjacent, groups))

    # 1) Optimized default: fused single-matmul kernel, bf16 MXU inputs.
    fwd_bf16 = jax.jit(functools.partial(gcn_unit_forward, groups=groups))
    out_bf16 = jax.block_until_ready(fwd_bf16(x, weight, bias, adjacent))
    assert out_bf16.shape == (B, conv_out, T, V), out_bf16.shape
    assert jnp.allclose(out_bf16, ref, atol=5e-2, rtol=5e-2), (
        float(jnp.max(jnp.abs(out_bf16 - ref))))

    # 2) Fused path in full f32 (exact up to matmul rounding).
    fwd_f32 = jax.jit(functools.partial(
        gcn_unit_forward, groups=groups, compute_dtype=jnp.float32))
    out_f32 = jax.block_until_ready(fwd_f32(x, weight, bias, adjacent))
    assert jnp.allclose(out_f32, ref, atol=1e-3, rtol=1e-3), (
        float(jnp.max(jnp.abs(out_f32 - ref))))

    # 3) Un-fused two-matmul fallback (large-channel path), f32, for coverage.
    fwd_uf = jax.jit(functools.partial(
        gcn_unit_forward, groups=groups, compute_dtype=jnp.float32, fuse=False))
    out_uf = jax.block_until_ready(fwd_uf(x, weight, bias, adjacent))
    assert jnp.allclose(out_uf, ref, atol=1e-3, rtol=1e-3), (
        float(jnp.max(jnp.abs(out_uf - ref))))

    print("KERNEL_OK")
</pallas_src>

<mosaic_0001>
module attributes {stable_mosaic.version = 11 : i64} {
  func.func @_gcn_fused_kernel(%arg0: i32, %arg1: memref<8x64xbf16, #tpu.memory_space<vmem>>, %arg2: memref<64x256xbf16, #tpu.memory_space<vmem>>, %arg3: memref<1x256xf32, #tpu.memory_space<vmem>>, %arg4: memref<8x256xf32, #tpu.memory_space<vmem>>) attributes {dimension_semantics = [#tpu.dimension_semantics<parallel>], iteration_bounds = array<i64: 2>, scalar_prefetch = 0 : i64, scratch_operands = 0 : i64, tpu.core_type = #tpu.core_type<tc>, window_params = [{transform_indices = @transform_0, window_bounds = array<i64: 8, 64>}, {pipeline_mode = #tpu.pipeline_mode<synchronous>, transform_indices = @transform_1, window_bounds = array<i64: 64, 256>}, {pipeline_mode = #tpu.pipeline_mode<synchronous>, transform_indices = @transform_2, window_bounds = array<i64: 1, 256>}, {transform_indices = @transform_3, window_bounds = array<i64: 8, 256>}]} {
    %c0 = arith.constant 0 : index
    %c0_0 = arith.constant 0 : index
    %0 = vector.load %arg1[%c0, %c0_0] : memref<8x64xbf16, #tpu.memory_space<vmem>>, vector<8x64xbf16>
    %c0_1 = arith.constant 0 : index
    %c0_2 = arith.constant 0 : index
    %1 = vector.load %arg2[%c0_1, %c0_2] : memref<64x256xbf16, #tpu.memory_space<vmem>>, vector<64x256xbf16>
    %cst = arith.constant dense<0.000000e+00> : vector<8x256xf32>
    %2 = tpu.matmul %0, %1, %cst {dimension_numbers = #tpu.dot_dimension_numbers<[1], [0], [0], [1], [0, 0, 1, 1], [], []>} : vector<8x64xbf16>, vector<64x256xbf16>, vector<8x256xf32> -> vector<8x256xf32>
    %c0_3 = arith.constant 0 : index
    %c0_4 = arith.constant 0 : index
    %3 = vector.load %arg3[%c0_3, %c0_4] : memref<1x256xf32, #tpu.memory_space<vmem>>, vector<1x256xf32>
    %4 = vector.broadcast %3 : vector<1x256xf32> to vector<8x256xf32>
    %5 = arith.addf %2, %4 : vector<8x256xf32>
    %c0_5 = arith.constant 0 : index
    %c0_6 = arith.constant 0 : index
    %6 = vector.load %arg4[%c0_5, %c0_6] : memref<8x256xf32, #tpu.memory_space<vmem>>, vector<8x256xf32>
    tpu.vector_store %arg4[%c0_5, %c0_6], %5 {strides = array<i32>} : memref<8x256xf32, #tpu.memory_space<vmem>>, vector<8x256xf32>,
    return
  }
  func.func @transform_0(%arg0: i32) -> (i32, i32) {
    %c0_i32 = arith.constant 0 : i32
    %c0_i32_0 = arith.constant 0 : i32
    return %arg0, %c0_i32 : i32, i32
  }
  func.func @transform_1(%arg0: i32) -> (i32, i32) {
    %c0_i32 = arith.constant 0 : i32
    %c0_i32_0 = arith.constant 0 : i32
    %c0_i32_1 = arith.constant 0 : i32
    return %c0_i32, %c0_i32_0 : i32, i32
  }
  func.func @transform_2(%arg0: i32) -> (i32, i32) {
    %c0_i32 = arith.constant 0 : i32
    %c0_i32_0 = arith.constant 0 : i32
    %c0_i32_1 = arith.constant 0 : i32
    return %c0_i32, %c0_i32_0 : i32, i32
  }
  func.func @transform_3(%arg0: i32) -> (i32, i32) {
    %c0_i32 = arith.constant 0 : i32
    %c0_i32_0 = arith.constant 0 : i32
    return %arg0, %c0_i32 : i32, i32
  }
}

</mosaic_0001>

<llo_original>
// kernel: gcn_unit_forward.1
$region0: #{gcn_unit_forward.1}
  #allocation0 [shape = 'u32[]', space=smem, size = 0x4, offset = 0x4, fixed_abs, tag = 'smem constant byte address 0x4 - core index']
  #allocation1 [shape = 'u32[72,128]{1,0:T(1,128)}', space=vmem, size = 0x9000, scoped, tag = 'internal scratch']
  %s0 = inlined_call_operand.vmem [shape: bf16[16,64], index: 0, kind: input, shape index: {}]
  %s1 = inlined_call_operand.vmem [shape: bf16[64,256], index: 1, kind: input, shape index: {}]
  %s2 = inlined_call_operand.vmem [shape: f32[1,256], index: 2, kind: input, shape index: {}]
  %s3 = inlined_call_operand.vmem [shape: f32[16,256], index: 3, kind: output, shape index: {}]
  %s4 = sld [smem:[#allocation0]]
  $region45: #{gcn_unit_forward.1} parent=0
    _
  %s6 = ssub.s32 1, %s4
  %s7 = scalar_select 0, %s6, %s4
  loop: start=0, step=1, limit=4
  $region2: #{gcn_unit_forward.1} parent=0 // loop_pre_header
    _
  $region3: #{gcn_unit_forward.1} parent=0 // loop_header
    %s9 = sphi 0, %s13
    %p10 = scmp.ge.s32.totalorder %s9, 4
    %s19 = sphi 0, %s21
    %s22 = sphi 0, %s19
    %s23 = sphi 0, %s22
    %s39 = sphi 0, %s23
    %s43 = sphi 0, %s43
    %s45 = sphi 0, %s43
    %s46 = sphi 0, %s45
    %s60 = sphi 0, %s46
    %s64 = sphi 0, %s64
    %s66 = sphi 0, %s64
    %s67 = sphi 0, %s66
    %s81 = sphi 0, %s67
    %s87 = sphi 0, %s89
    %s90 = sphi 0, %s87
    %s91 = sphi 0, %s90
    %s107 = sphi 0, %s91
  $region4: #{gcn_unit_forward.1} parent=0 // loop_header_branch
    %12 = sbr.rel (%p10) target = $region8
  $region5: #{gcn_unit_forward.1} parent=0 // loop_body
    %s14 = ssub.s32 %s9, 1
    %s15 = ssub.s32 %s9, 2
    %s16 = sadd.s32 %s9, 1
    %s17 = ssub.s32 %s9, %s16
    %p18 = scmp.eq.s32.totalorder %s17, 0
    %s20 = sadd.s32 %s19, 1
    %s21 = scalar_select %p18, %s19, %s20
    %p24 = pneg %p18
    %p25 = scmp.eq.s32.totalorder %s9, 1
    %p26 = por %p24, %p25
    %p27 = scmp.ne.s32.totalorder %s19, %s22
    %p28 = scmp.eq.s32.totalorder %s9, 0
    %p29 = por %p27, %p28
    %p30 = scmp.ne.s32.totalorder %s19, %s22
    %p31 = scmp.eq.s32.totalorder %s14, 1
    %p32 = por %p30, %p31
    %p33 = scmp.ne.s32.totalorder %s22, %s23
    %p34 = scmp.eq.s32.totalorder %s14, 0
    %p35 = por %p33, %p34
    %p36 = scmp.ne.s32.totalorder %s22, %s23
    %p37 = scmp.eq.s32.totalorder %s15, 1
    %p38 = por %p36, %p37
    %p40 = scmp.ne.s32.totalorder %s23, %s39
    %p41 = scmp.eq.s32.totalorder %s15, 0
    %p42 = por %p40, %p41
    %s44 = sadd.s32 %s43, 1
    %p47 = scmp.eq.s32.totalorder %s9, 1
    %p48 = scmp.ne.s32.totalorder %s43, %s45
    %p49 = scmp.eq.s32.totalorder %s9, 0
    %p50 = por %p48, %p49
    %p51 = scmp.ne.s32.totalorder %s43, %s45
    %p52 = scmp.eq.s32.totalorder %s14, 1
    %p53 = por %p51, %p52
    %p54 = scmp.ne.s32.totalorder %s45, %s46
    %p55 = scmp.eq.s32.totalorder %s14, 0
    %p56 = por %p54, %p55
    %p57 = scmp.ne.s32.totalorder %s45, %s46
    %p58 = scmp.eq.s32.totalorder %s15, 1
    %p59 = por %p57, %p58
    %p61 = scmp.ne.s32.totalorder %s46, %s60
    %p62 = scmp.eq.s32.totalorder %s15, 0
    %p63 = por %p61, %p62
    %s65 = sadd.s32 %s64, 1
    %p68 = scmp.eq.s32.totalorder %s9, 1
    %p69 = scmp.ne.s32.totalorder %s64, %s66
    %p70 = scmp.eq.s32.totalorder %s9, 0
    %p71 = por %p69, %p70
    %p72 = scmp.ne.s32.totalorder %s64, %s66
    %p73 = scmp.eq.s32.totalorder %s14, 1
    %p74 = por %p72, %p73
    %p75 = scmp.ne.s32.totalorder %s66, %s67
    %p76 = scmp.eq.s32.totalorder %s14, 0
    %p77 = por %p75, %p76
    %p78 = scmp.ne.s32.totalorder %s66, %s67
    %p79 = scmp.eq.s32.totalorder %s15, 1
    %p80 = por %p78, %p79
    %p82 = scmp.ne.s32.totalorder %s67, %s81
    %p83 = scmp.eq.s32.totalorder %s15, 0
    %p84 = por %p82, %p83
    %s85 = ssub.s32 %s9, %s16
    %p86 = scmp.eq.s32.totalorder %s85, 0
    %s88 = sadd.s32 %s87, 1
    %s89 = scalar_select %p86, %s87, %s88
    %p92 = pneg %p86
    %p93 = scmp.eq.s32.totalorder %s9, 1
    %p94 = por %p92, %p93
    %p95 = scmp.ne.s32.totalorder %s87, %s90
    %p96 = scmp.eq.s32.totalorder %s9, 0
    %p97 = por %p95, %p96
    %p98 = scmp.ne.s32.totalorder %s87, %s90
    %p99 = scmp.eq.s32.totalorder %s14, 1
    %p100 = por %p98, %p99
    %p101 = scmp.ne.s32.totalorder %s90, %s91
    %p102 = scmp.eq.s32.totalorder %s14, 0
    %p103 = por %p101, %p102
    %p104 = scmp.ne.s32.totalorder %s90, %s91
    %p105 = scmp.eq.s32.totalorder %s15, 1
    %p106 = por %p104, %p105
    %p108 = scmp.ne.s32.totalorder %s91, %s107
    %p109 = scmp.eq.s32.totalorder %s15, 0
    %p110 = por %p108, %p109
    %p111 = scmp.le.s32.totalorder 1, %s9
    %p112 = scmp.lt.s32.totalorder %s9, 3
    %p113 = pnand %p111, %p112
    %p114 = pneg %p113
    // Predicated region
    $region9: #{gcn_unit_forward.1} parent=5 // pred_check
      _
    $region10: #{gcn_unit_forward.1} parent=5 // pred_check_branch
      %116 = sbr.rel (%p113) target = $region12
    $region11: #{gcn_unit_forward.1} parent=5 // pred_region
      %s117 = ssub.s32 %s9, 1
      // Predicated region
      $region13: #{gcn_unit_forward.1} parent=11 // pred_check
        %p118 = pneg %p56
      $region14: #{gcn_unit_forward.1} parent=11 // pred_check_branch
        %120 = sbr.rel (%p118) target = $region16
      $region15: #{gcn_unit_forward.1} parent=11 // pred_region
        _
      $region16: #{gcn_unit_forward.1} parent=11 // pred_fallthru
        _
      // Predicated region
      $region17: #{gcn_unit_forward.1} parent=11 // pred_check
        %p121 = pneg %p77
      $region18: #{gcn_unit_forward.1} parent=11 // pred_check_branch
        %123 = sbr.rel (%p121) target = $region20
      $region19: #{gcn_unit_forward.1} parent=11 // pred_region
        _
      $region20: #{gcn_unit_forward.1} parent=11 // pred_fallthru
        _
    $region12: #{gcn_unit_forward.1} parent=5 // pred_fallthru
      _
    %p124 = scmp.lt.s32.totalorder %s9, 2
    // Predicated region
    $region21: #{gcn_unit_forward.1} parent=5 // pred_check
      %p125 = pneg %p124
    $region22: #{gcn_unit_forward.1} parent=5 // pred_check_branch
      %127 = sbr.rel (%p125) target = $region24
    $region23: #{gcn_unit_forward.1} parent=5 // pred_region
      // Predicated region
      $region25: #{gcn_unit_forward.1} parent=23 // pred_check
        %p128 = pneg %p29
      $region26: #{gcn_unit_forward.1} parent=23 // pred_check_branch
        %130 = sbr.rel (%p128) target = $region28
      $region27: #{gcn_unit_forward.1} parent=23 // pred_region
        %p131 = scmp.lt.s32.totalorder %s9, 1
        %s132 = scalar_select %p131, %s9, 1
        %s133 = smul.addr %s132, 4
        %s134 = scalar_lea.vmem %s0, %s133
      $region28: #{gcn_unit_forward.1} parent=23 // pred_fallthru
        _
    $region24: #{gcn_unit_forward.1} parent=5 // pred_fallthru
      _
    %p135 = scmp.le.s32.totalorder 1, %s9
    %p136 = scmp.lt.s32.totalorder %s9, 3
    %p137 = pnand %p135, %p136
    %p138 = pneg %p137
    // Predicated region
    $region29: #{gcn_unit_forward.1} parent=5 // pred_check
      _
    $region30: #{gcn_unit_forward.1} parent=5 // pred_check_branch
      %140 = sbr.rel (%p137) target = $region32
    $region31: #{gcn_unit_forward.1} parent=5 // pred_region
      %s141 = ssub.s32 %s9, 1
      %p142 = scmp.lt.s32.totalorder %s14, 1
      %s143 = scalar_select %p142, %s14, 1
      %s144 = smul.addr %s143, 4
      %s145 = scalar_lea.vmem %s0, %s144
      %p146 = pneg %p35
      %p147 = pneg %p32
      %p148 = pneg %p56
      %p149 = pneg %p53
      %p150 = pneg %p77
      %p151 = pneg %p74
      %p152 = pneg %p103
      %p153 = pneg %p100
      %p154 = scmp.lt.s32.totalorder %s14, 1
      %s155 = scalar_select %p154, %s14, 1
      %s156 = smul.addr %s155, 2
      %s157 = smul.addr %s156, 8
      %s158 = scalar_lea.vmem %s3, %s157
      %p159 = scmp.lt.s32.totalorder %s14, 1
      %s160 = scalar_select %p159, %s14, 1
      %s161 = smul.addr %s160, 4
      %s162 = scalar_lea.vmem %s0, %s161
      %p163 = scmp.lt.s32.totalorder %s14, 1
      %s164 = scalar_select %p163, %s14, 1
      %s165 = smul.addr %s164, 2
      %s166 = smul.addr %s165, 8
      %s167 = scalar_lea.vmem %s3, %s166
      %v169 = vld [vmem:[%s162] sm:$0xf]
      %v170 = vld [vmem:[%s1] sm:$0xff]
      %v171 = vld [vmem:[%s1 + $0x8] sm:$0xff]
      %v172 = vld [vmem:[%s1 + $0x10] sm:$0xff]
      %v173 = vld [vmem:[%s1 + $0x18] sm:$0xff]
      %v174 = vld [vmem:[%s1 + $0x20] sm:$0xff]
      %v175 = vld [vmem:[%s1 + $0x28] sm:$0xff]
      %v176 = vld [vmem:[%s1 + $0x30] sm:$0xff]
      %v177 = vld [vmem:[%s1 + $0x38] sm:$0xff]
      %v178 = vld [vmem:[%s2] sm:$0x3]
      %v180 = vperm.slane %v178, 0
      %v181 = vperm.slane %v178, 1
      %v192 = vunpack.c.l.b16 %v170
      %v193 = vunpack.c.h.b16 %v170
      %v194 = vunpack.c.l.b16 %v171
      %v195 = vunpack.c.h.b16 %v171
      %v196 = vunpack.c.l.b16 %v172
      %v197 = vunpack.c.h.b16 %v172
      %v198 = vunpack.c.l.b16 %v173
      %v199 = vunpack.c.h.b16 %v173
      %v200 = vunpack.c.l.b16 %v174
      %v201 = vunpack.c.h.b16 %v174
      %v202 = vunpack.c.l.b16 %v175
      %v203 = vunpack.c.h.b16 %v175
      %v204 = vunpack.c.l.b16 %v176
      %v205 = vunpack.c.h.b16 %v176
      %v206 = vunpack.c.l.b16 %v177
      %v207 = vunpack.c.h.b16 %v177
      %v208 = vpack.c.b16 %v194, %v192
      %v209 = vpack.c.b16 %v195, %v193
      %v210 = vpack.c.b16 %v198, %v196
      %v211 = vpack.c.b16 %v199, %v197
      %v212 = vpack.c.b16 %v202, %v200
      %v213 = vpack.c.b16 %v203, %v201
      %v214 = vpack.c.b16 %v206, %v204
      %v215 = vpack.c.b16 %v207, %v205
      %vm224 = vcmask 523264
      %v226 = vsel %vm224, %v169, 0
      %228 = vmatpush.bf16.msra.mxu0 0
      %229 = vmatpush.bf16.msra.mxu0 0
      %230 = vmatpush.bf16.msra.mxu0 0
      %231 = vmatpush.bf16.msra.mxu0 0
      %232 = vmatpush.bf16.msra.mxu0 %v214
      %233 = vmatpush.bf16.msra.mxu0 %v212
      %234 = vmatpush.bf16.msra.mxu0 %v210
      %235 = vmatpush.bf16.msra.mxu0 %v208
      %236 = vmatmul.bf16.gmra.mxu0 %v226
      %v237 = vpop.f32.mrf.mxu0
      %v238 = vadd.f32 %v180, %v237
      %v239 = vpop.f32.mrf.mxu0
      %240 = vdwg.mxu0
      %241 = vmatpush.bf16.msra.mxu0 0
      %242 = vmatpush.bf16.msra.mxu0 0
      %243 = vmatpush.bf16.msra.mxu0 0
      %244 = vmatpush.bf16.msra.mxu0 0
      %245 = vmatpush.bf16.msra.mxu0 %v215
      %246 = vmatpush.bf16.msra.mxu0 %v213
      %247 = vmatpush.bf16.msra.mxu0 %v211
      %248 = vmatpush.bf16.msra.mxu0 %v209
      %249 = vmatmul.bf16.gmra.mxu0 %v226
      %v250 = vpop.f32.mrf.mxu0
      %v251 = vadd.f32 %v181, %v250
      %v252 = vpop.f32.mrf.mxu0
      %253 = vdwg.mxu0
      %254 = vst [vmem:[%s167] sm:$0xff] %v238
      %255 = vst [vmem:[%s167 + $0x8] sm:$0xff] %v251
      %p256 = scmp.lt.s32.totalorder %s14, 1
      %s257 = scalar_select %p256, %s14, 1
      %s258 = smul.addr %s257, 2
      %s259 = smul.addr %s258, 8
      %s260 = scalar_lea.vmem %s3, %s259
      // Predicated region
      $region33: #{gcn_unit_forward.1} parent=31 // pred_check
        %p261 = pneg %p100
      $region34: #{gcn_unit_forward.1} parent=31 // pred_check_branch
        %263 = sbr.rel (%p261) target = $region36
      $region35: #{gcn_unit_forward.1} parent=31 // pred_region
        _
      $region36: #{gcn_unit_forward.1} parent=31 // pred_fallthru
        _
    $region32: #{gcn_unit_forward.1} parent=5 // pred_fallthru
      _
    %p264 = scmp.le.s32.totalorder 2, %s9
    // Predicated region
    $region37: #{gcn_unit_forward.1} parent=5 // pred_check
      %p265 = pneg %p264
    $region38: #{gcn_unit_forward.1} parent=5 // pred_check_branch
      %267 = sbr.rel (%p265) target = $region40
    $region39: #{gcn_unit_forward.1} parent=5 // pred_region
      %s268 = ssub.s32 %s9, 2
      // Predicated region
      $region41: #{gcn_unit_forward.1} parent=39 // pred_check
        %p269 = pneg %p106
      $region42: #{gcn_unit_forward.1} parent=39 // pred_check_branch
        %271 = sbr.rel (%p269) target = $region44
      $region43: #{gcn_unit_forward.1} parent=39 // pred_region
        %p272 = scmp.lt.s32.totalorder %s15, 1
        %s273 = scalar_select %p272, %s15, 1
        %s274 = smul.addr %s273, 2
        %s275 = smul.addr %s274, 8
        %s276 = scalar_lea.vmem %s3, %s275
      $region44: #{gcn_unit_forward.1} parent=39 // pred_fallthru
        _
    $region40: #{gcn_unit_forward.1} parent=5 // pred_fallthru
      _
  $region6: #{gcn_unit_forward.1} parent=0 // loop_footer
    %s13 = sadd.s32 1, %s9
  $region7: #{gcn_unit_forward.1} parent=0 // loop_footer_branch
    %8 = sbr.rel target = $region3
  $region8: #{gcn_unit_forward.1} parent=0 // loop_exit
    _

</llo_original>
